<compile_context>
chip_gen: v7x
topology: tpu7x:2x2x1
jax: 0.10.0
libtpu: 0.0.40
codegen_flags: <defaults>
</compile_context>

<pallas_src>
import functools

import jax
import jax.numpy as jnp
from jax.experimental import pallas as pl
from jax.experimental.pallas import tpu as pltpu


def mlp_kernel(x_ref, w1_ref, b1_ref, w2_ref, b2_ref, w3t_ref, b3_ref, o_ref,
               *, use_bf16_matmul: bool):
    x = x_ref[...]                        # (TB, D)
    w1 = w1_ref[...]                      # (D, 128)
    w2 = w2_ref[...]                      # (128, 64)
    if use_bf16_matmul:
        x = x.astype(jnp.bfloat16)
        w1 = w1.astype(jnp.bfloat16)
        w2 = w2.astype(jnp.bfloat16)

    h1 = jnp.dot(x, w1, preferred_element_type=jnp.float32)              # (TB, 128)
    h1 = jnp.maximum(h1 + b1_ref[...], 0.0)                              # ReLU (f32 VPU)
    h1_mm = h1.astype(jnp.bfloat16) if use_bf16_matmul else h1
    h2 = jnp.dot(h1_mm, w2_ref[...].astype(h1_mm.dtype) if False else w2,
                 preferred_element_type=jnp.float32)                     # (TB, 64)
    h2 = jnp.maximum(h2 + b2_ref[...], 0.0)                              # ReLU (f32 VPU)

    # fc3 as a lane-dense contraction: (1, 64) . (TB, 64)^T -> (1, TB), so per-row
    # logits land along lanes and the (1, tile_b) output block is stored densely.
    # TODO(synk): verify via pl.lower_as_mlir that this does not materialize an XLU
    # transpose of h2 every step; a transposed copy is budgeted in the VMEM estimate
    # and should hide under the x DMA (kernel is HBM-bound), but if it shows on the
    # critical path replace with a VPU multiply + lane-reduce.
    logits = jax.lax.dot_general(
        w3t_ref[...], h2,
        dimension_numbers=(((1,), (1,)), ((), ())),
        preferred_element_type=jnp.float32,
    ) + b3_ref[...]                                                      # (1, TB)

    # Exact sigmoid: exp runs on the EUP; the divide is only ~tile_b/1024 vregs.
    y = 1.0 / (1.0 + jnp.exp(-logits))
    o_ref[...] = y.astype(o_ref.dtype)                                   # dense (1, TB) store


def _round_up(x, m):
    return ((x + m - 1) // m) * m


def _vmem_bytes_estimate(tile_b, d, x_buffers):
    """Conservative per-step VMEM footprint in bytes (f32, incl. lane/sublane padding)."""
    f32 = 4
    d_pad = max(_round_up(d, 128), 128)           # x tile lane-pads to >=128 lanes
    x_tiles = x_buffers * tile_b * d_pad * f32    # pipelined x tiles
    out_tiles = 2 * 8 * tile_b * f32              # (1, tile_b) out block, 8-sublane padded, 2 buffers
    h1 = tile_b * 128 * f32
    h2 = 2 * tile_b * 64 * f32                    # h2 + possible transposed copy for fc3 dot
    logits = 2 * 8 * tile_b * f32                 # logits / sigmoid temps, 8-sublane padded
    weights = 2 * (d_pad * 128 + 128 * 128 + 4 * 8 * 128) * f32
    return x_tiles + out_tiles + h1 + h2 + logits + weights


def _tpu_vmem_capacity_bytes():
    try:
        return int(pltpu.get_tpu_info().vmem_capacity_bytes)
    except Exception:
        return None


def mlp_forward(x, params, *, tile_b=None, target_x_tile_bytes=8 << 20,
                use_bf16_matmul=False):
    """x: (B, input_size) float32. params: dict of weights/biases. Returns (B, 1)."""
    B, D = x.shape
    w1, b1 = params["w1"], params["b1"]   # (D, 128), (1, 128)
    w2, b2 = params["w2"], params["b2"]   # (128, 64), (1, 64)
    w3, b3 = params["w3"], params["b3"]   # (64, 1),  (1, 1)
    w3t = w3.T                            # (1, 64) for the lane-dense last layer

    # --- Generation-specific budgets (detected via VMEM capacity). ---
    vmem_cap = _tpu_vmem_capacity_bytes()
    if vmem_cap is not None and vmem_cap > (64 << 20):
        # v5e / v6e: 128 MiB physical VMEM, 1 TC.
        vmem_limit, x_buffers, force_two_tiles = 96 << 20, 2, False
    elif vmem_cap is not None:
        # v7x-like: 64 MiB per-TC VMEM, 2 TCs -> need >= 2 grid steps; deeper x pipeline.
        vmem_limit, x_buffers, force_two_tiles = 48 << 20, 3, True
    else:
        # Unknown hardware: conservative limit, plain double-buffering.
        vmem_limit, x_buffers, force_two_tiles = 48 << 20, 2, False
    vmem_budget = int(vmem_limit * 0.85)

    # --- Batch tile selection (multiple of 128 lanes for the lane-dense output). ---
    B128 = _round_up(B, 128)
    x_row_bytes = max(_round_up(D, 128), 128) * 4          # lane-padded row
    if tile_b is None:
        tile_b = max(128, (int(target_x_tile_bytes) // x_row_bytes) // 128 * 128)
    tile_b = max(128, _round_up(int(tile_b), 128))
    tile_b = min(tile_b, B128)                              # never tile past the batch
    if force_two_tiles and B128 >= 256:
        half = ((B128 // 128 + 1) // 2) * 128               # ceil(B128/2) as a 128-multiple
        tile_b = min(tile_b, half)
    while tile_b > 128 and _vmem_bytes_estimate(tile_b, D, x_buffers) > vmem_budget:
        tile_b = max(128, ((tile_b // 2) // 128) * 128)

    est = _vmem_bytes_estimate(tile_b, D, x_buffers)
    hard_cap = (vmem_cap - (8 << 20)) if vmem_cap else (96 << 20)
    vmem_limit = int(min(max(vmem_limit, est + (4 << 20)), hard_cap))

    num_tiles = (B + tile_b - 1) // tile_b                  # partial last block is masked

    # --- Block specs: x tiled over batch; weights resident (same block every step). ---
    if x_buffers != 2:
        x_spec = pl.BlockSpec((tile_b, D), lambda i: (i, 0),
                              pipeline_mode=pl.Buffered(x_buffers))
    else:
        x_spec = pl.BlockSpec((tile_b, D), lambda i: (i, 0))
    in_specs = [
        x_spec,
        pl.BlockSpec(w1.shape, lambda i: (0, 0)),
        pl.BlockSpec(b1.shape, lambda i: (0, 0)),
        pl.BlockSpec(w2.shape, lambda i: (0, 0)),
        pl.BlockSpec(b2.shape, lambda i: (0, 0)),
        pl.BlockSpec(w3t.shape, lambda i: (0, 0)),
        pl.BlockSpec(b3.shape, lambda i: (0, 0)),
    ]
    # Lane-dense output: (1, B) array, each grid step writes a full (1, tile_b) slab.
    out_spec = pl.BlockSpec((1, tile_b), lambda i: (0, i))

    rows = num_tiles * tile_b
    weight_elems = D * 128 + 128 + 128 * 64 + 64 + 64 + 1
    cost = pl.CostEstimate(
        flops=2 * rows * (D * 128 + 128 * 64 + 64) + 5 * rows * (128 + 64 + 1),
        transcendentals=rows,
        bytes_accessed=B * D * 4 + B * 4 + weight_elems * 4,
    )

    out = pl.pallas_call(
        functools.partial(mlp_kernel, use_bf16_matmul=use_bf16_matmul),
        out_shape=jax.ShapeDtypeStruct((1, B), jnp.float32),
        grid_spec=pltpu.PrefetchScalarGridSpec(
            num_scalar_prefetch=0,
            grid=(num_tiles,),
            in_specs=in_specs,
            out_specs=out_spec,
        ),
        compiler_params=pltpu.CompilerParams(
            dimension_semantics=("parallel",),
            vmem_limit_bytes=vmem_limit,
        ),
        cost_estimate=cost,
    )(x, w1, b1, w2, b2, w3t, b3)

    return out.reshape(B, 1)


def init_params(key, input_size):
    """Deterministic init mimicking torch.nn.Linear (uniform +/- 1/sqrt(fan_in))."""
    ks = jax.random.split(key, 6)

    def linear(kw, kb, fan_in, fan_out):
        bound = 1.0 / jnp.sqrt(fan_in)
        w = jax.random.uniform(kw, (fan_in, fan_out), jnp.float32, -bound, bound)
        b = jax.random.uniform(kb, (1, fan_out), jnp.float32, -bound, bound)
        return w, b

    w1, b1 = linear(ks[0], ks[1], input_size, 128)
    w2, b2 = linear(ks[2], ks[3], 128, 64)
    w3, b3 = linear(ks[4], ks[5], 64, 1)
    return {"w1": w1, "b1": b1, "w2": w2, "b2": b2, "w3": w3, "b3": b3}


if __name__ == "__main__":
    key = jax.random.PRNGKey(0)
    k_params, k_x = jax.random.split(key)

    batch = 8
    input_size = 32

    params = init_params(k_params, input_size)
    x = jax.random.normal(k_x, (batch, input_size), dtype=jnp.float32)

    out = jax.block_until_ready(mlp_forward(x, params))

    # Reference check in plain JAX (same math) for sanity.
    def ref(x, p):
        h = jnp.maximum(x @ p["w1"] + p["b1"], 0.0)
        h = jnp.maximum(h @ p["w2"] + p["b2"], 0.0)
        return jax.nn.sigmoid(h @ p["w3"] + p["b3"])

    expected = ref(x, params)
    assert out.shape == (batch, 1)
    assert jnp.allclose(out, expected, atol=1e-3, rtol=1e-3), float(
        jnp.max(jnp.abs(out - expected))
    )

    print("KERNEL_OK")
</pallas_src>

<mosaic_0001>
module attributes {stable_mosaic.version = 11 : i64} {
  func.func @mlp_kernel(%arg0: i32, %arg1: memref<128x32xf32, #tpu.memory_space<vmem>>, %arg2: memref<32x128xf32, #tpu.memory_space<vmem>>, %arg3: memref<1x128xf32, #tpu.memory_space<vmem>>, %arg4: memref<128x64xf32, #tpu.memory_space<vmem>>, %arg5: memref<1x64xf32, #tpu.memory_space<vmem>>, %arg6: memref<1x64xf32, #tpu.memory_space<vmem>>, %arg7: memref<1x1xf32, #tpu.memory_space<vmem>>, %arg8: memref<1x128xf32, #tpu.memory_space<vmem>>) attributes {dimension_semantics = [#tpu.dimension_semantics<parallel>], iteration_bounds = array<i64: 1>, scalar_prefetch = 0 : i64, scratch_operands = 0 : i64, tpu.core_type = #tpu.core_type<tc>, window_params = [{transform_indices = @transform_0, window_bounds = array<i64: 128, 32>}, {pipeline_mode = #tpu.pipeline_mode<synchronous>, transform_indices = @transform_1, window_bounds = array<i64: 32, 128>}, {pipeline_mode = #tpu.pipeline_mode<synchronous>, transform_indices = @transform_2, window_bounds = array<i64: 1, 128>}, {pipeline_mode = #tpu.pipeline_mode<synchronous>, transform_indices = @transform_3, window_bounds = array<i64: 128, 64>}, {pipeline_mode = #tpu.pipeline_mode<synchronous>, transform_indices = @transform_4, window_bounds = array<i64: 1, 64>}, {pipeline_mode = #tpu.pipeline_mode<synchronous>, transform_indices = @transform_5, window_bounds = array<i64: 1, 64>}, {pipeline_mode = #tpu.pipeline_mode<synchronous>, transform_indices = @transform_6, window_bounds = array<i64: 1, 1>}, {transform_indices = @transform_7, window_bounds = array<i64: 1, 128>}]} {
    %c0 = arith.constant 0 : index
    %c0_0 = arith.constant 0 : index
    %0 = vector.load %arg1[%c0, %c0_0] : memref<128x32xf32, #tpu.memory_space<vmem>>, vector<128x32xf32>
    %c0_1 = arith.constant 0 : index
    %c0_2 = arith.constant 0 : index
    %1 = vector.load %arg2[%c0_1, %c0_2] : memref<32x128xf32, #tpu.memory_space<vmem>>, vector<32x128xf32>
    %c0_3 = arith.constant 0 : index
    %c0_4 = arith.constant 0 : index
    %2 = vector.load %arg4[%c0_3, %c0_4] : memref<128x64xf32, #tpu.memory_space<vmem>>, vector<128x64xf32>
    %cst = arith.constant dense<0.000000e+00> : vector<128x128xf32>
    %3 = tpu.matmul %0, %1, %cst {dimension_numbers = #tpu.dot_dimension_numbers<[1], [0], [0], [1], [0, 0, 1, 1], [], []>} : vector<128x32xf32>, vector<32x128xf32>, vector<128x128xf32> -> vector<128x128xf32>
    %c0_5 = arith.constant 0 : index
    %c0_6 = arith.constant 0 : index
    %4 = vector.load %arg3[%c0_5, %c0_6] : memref<1x128xf32, #tpu.memory_space<vmem>>, vector<1x128xf32>
    %5 = vector.broadcast %4 : vector<1x128xf32> to vector<128x128xf32>
    %6 = arith.addf %3, %5 : vector<128x128xf32>
    %cst_7 = arith.constant 0.000000e+00 : f32
    %7 = vector.broadcast %cst_7 : f32 to vector<128x128xf32>
    %8 = arith.maximumf %6, %7 : vector<128x128xf32>
    %cst_8 = arith.constant dense<0.000000e+00> : vector<128x64xf32>
    %9 = tpu.matmul %8, %2, %cst_8 {dimension_numbers = #tpu.dot_dimension_numbers<[1], [0], [0], [1], [0, 0, 1, 1], [], []>} : vector<128x128xf32>, vector<128x64xf32>, vector<128x64xf32> -> vector<128x64xf32>
    %c0_9 = arith.constant 0 : index
    %c0_10 = arith.constant 0 : index
    %10 = vector.load %arg5[%c0_9, %c0_10] : memref<1x64xf32, #tpu.memory_space<vmem>>, vector<1x64xf32>
    %11 = vector.broadcast %10 : vector<1x64xf32> to vector<128x64xf32>
    %12 = arith.addf %9, %11 : vector<128x64xf32>
    %cst_11 = arith.constant 0.000000e+00 : f32
    %13 = vector.broadcast %cst_11 : f32 to vector<128x64xf32>
    %14 = arith.maximumf %12, %13 : vector<128x64xf32>
    %c0_12 = arith.constant 0 : index
    %c0_13 = arith.constant 0 : index
    %15 = vector.load %arg6[%c0_12, %c0_13] : memref<1x64xf32, #tpu.memory_space<vmem>>, vector<1x64xf32>
    %cst_14 = arith.constant dense<0.000000e+00> : vector<1x128xf32>
    %16 = tpu.matmul %15, %14, %cst_14 {dimension_numbers = #tpu.dot_dimension_numbers<[1], [1], [0], [0], [0, 0, 1, 0], [], []>} : vector<1x64xf32>, vector<128x64xf32>, vector<1x128xf32> -> vector<1x128xf32>
    %c0_15 = arith.constant 0 : index
    %c0_16 = arith.constant 0 : index
    %17 = vector.load %arg7[%c0_15, %c0_16] : memref<1x1xf32, #tpu.memory_space<vmem>>, vector<1x1xf32>
    %18 = vector.broadcast %17 : vector<1x1xf32> to vector<1x128xf32>
    %19 = arith.addf %16, %18 : vector<1x128xf32>
    %cst_17 = arith.constant 0.000000e+00 : f32
    %20 = vector.broadcast %cst_17 : f32 to vector<1x128xf32>
    %21 = arith.subf %20, %19 : vector<1x128xf32>
    %22 = math.exp %21 : vector<1x128xf32>
    %cst_18 = arith.constant 1.000000e+00 : f32
    %23 = vector.broadcast %cst_18 : f32 to vector<1x128xf32>
    %24 = arith.addf %23, %22 : vector<1x128xf32>
    %cst_19 = arith.constant 1.000000e+00 : f32
    %25 = vector.broadcast %cst_19 : f32 to vector<1x128xf32>
    %26 = arith.divf %25, %24 : vector<1x128xf32>
    %c0_20 = arith.constant 0 : index
    %c0_21 = arith.constant 0 : index
    %27 = vector.load %arg8[%c0_20, %c0_21] : memref<1x128xf32, #tpu.memory_space<vmem>>, vector<1x128xf32>
    tpu.vector_store %arg8[%c0_20, %c0_21], %26 {strides = array<i32>} : memref<1x128xf32, #tpu.memory_space<vmem>>, vector<1x128xf32>,
    return
  }
  func.func @transform_0(%arg0: i32) -> (i32, i32) {
    %c0_i32 = arith.constant 0 : i32
    %c0_i32_0 = arith.constant 0 : i32
    return %arg0, %c0_i32 : i32, i32
  }
  func.func @transform_1(%arg0: i32) -> (i32, i32) {
    %c0_i32 = arith.constant 0 : i32
    %c0_i32_0 = arith.constant 0 : i32
    %c0_i32_1 = arith.constant 0 : i32
    return %c0_i32, %c0_i32_0 : i32, i32
  }
  func.func @transform_2(%arg0: i32) -> (i32, i32) {
    %c0_i32 = arith.constant 0 : i32
    %c0_i32_0 = arith.constant 0 : i32
    %c0_i32_1 = arith.constant 0 : i32
    return %c0_i32, %c0_i32_0 : i32, i32
  }
  func.func @transform_3(%arg0: i32) -> (i32, i32) {
    %c0_i32 = arith.constant 0 : i32
    %c0_i32_0 = arith.constant 0 : i32
    %c0_i32_1 = arith.constant 0 : i32
    return %c0_i32, %c0_i32_0 : i32, i32
  }
  func.func @transform_4(%arg0: i32) -> (i32, i32) {
    %c0_i32 = arith.constant 0 : i32
    %c0_i32_0 = arith.constant 0 : i32
    %c0_i32_1 = arith.constant 0 : i32
    return %c0_i32, %c0_i32_0 : i32, i32
  }
  func.func @transform_5(%arg0: i32) -> (i32, i32) {
    %c0_i32 = arith.constant 0 : i32
    %c0_i32_0 = arith.constant 0 : i32
    %c0_i32_1 = arith.constant 0 : i32
    return %c0_i32, %c0_i32_0 : i32, i32
  }
  func.func @transform_6(%arg0: i32) -> (i32, i32) {
    %c0_i32 = arith.constant 0 : i32
    %c0_i32_0 = arith.constant 0 : i32
    %c0_i32_1 = arith.constant 0 : i32
    return %c0_i32, %c0_i32_0 : i32, i32
  }
  func.func @transform_7(%arg0: i32) -> (i32, i32) {
    %c0_i32 = arith.constant 0 : i32
    %c0_i32_0 = arith.constant 0 : i32
    return %c0_i32, %arg0 : i32, i32
  }
}

</mosaic_0001>

<llo_original>
// kernel: tpu_custom_call.1
$region0: #{tpu_custom_call.1}
  #allocation0 [shape = 'u32[]', space=smem, size = 0x4, offset = 0x4, fixed_abs, tag = 'smem constant byte address 0x4 - core index']
  #allocation1 [shape = 'u32[144,128]{1,0:T(1,128)}', space=vmem, size = 0x12000, scoped, tag = 'internal scratch']
  #allocation2 [shape = 'f32[1,1]{1,0:T(1,128)S(1)}', space=vmem, size = 0x200, scoped, tag = 'scoped memory for tpu_custom_call.1']
  %s0 = inlined_call_operand.vmem [shape: f32[8,32], index: 0, kind: input, shape index: {}]
  %s1 = inlined_call_operand.vmem [shape: f32[32,128], index: 1, kind: input, shape index: {}]
  %s2 = inlined_call_operand.vmem [shape: f32[1,128], index: 2, kind: input, shape index: {}]
  %s3 = inlined_call_operand.vmem [shape: f32[128,64], index: 3, kind: input, shape index: {}]
  %s4 = inlined_call_operand.vmem [shape: f32[1,64], index: 4, kind: input, shape index: {}]
  %s5 = inlined_call_operand.vmem [shape: f32[1,64], index: 5, kind: input, shape index: {}]
  %s6 = inlined_call_operand.<no memory space> [shape: f32[1,1], index: 6, kind: input, shape index: {}]
  %s7 = inlined_call_operand.hbm [shape: f32[1,8], index: 7, kind: output, shape index: {}]
  %s8 = sld [smem:[#allocation0]]
  $region38: #{tpu_custom_call.1} parent=0
    _
  %s10 = ssub.s32 1, %s8
  %s11 = scalar_select 0, %s10, %s8
  %v12 = vstv %s6
  %13 = vst [vmem:[#allocation2] sm:$0x1] %v12
  $region1: #{tpu_custom_call.1} parent=0
    #allocation3 [shape = 'u8[512]{0}', space=vmem, size = 0x400, scoped, tag = 'output window, operand 0, single buffered']
    #allocation4 [shape = 's32[1]{0}', space=sflag, size = 0x4, scoped, tag = 'scoped memory for tpu_custom_call.1']
    %14 = vsyncpa [#allocation4], 0
    // Predicated region
    $region2: #{tpu_custom_call.1} parent=1 // pred_check
      _
    $region3: #{tpu_custom_call.1} parent=1 // pred_check_branch
      %16 = sbr.rel (0) target = $region5
    $region4: #{tpu_custom_call.1} parent=1 // pred_region
      _
    $region5: #{tpu_custom_call.1} parent=1 // pred_fallthru
      _
    // Predicated region
    $region6: #{tpu_custom_call.1} parent=1 // pred_check
      _
    $region7: #{tpu_custom_call.1} parent=1 // pred_check_branch
      %18 = sbr.rel (0) target = $region9
    $region8: #{tpu_custom_call.1} parent=1 // pred_region
      _
    $region9: #{tpu_custom_call.1} parent=1 // pred_fallthru
      _
    // Predicated region
    $region10: #{tpu_custom_call.1} parent=1 // pred_check
      _
    $region11: #{tpu_custom_call.1} parent=1 // pred_check_branch
      %20 = sbr.rel (0) target = $region13
    $region12: #{tpu_custom_call.1} parent=1 // pred_region
      _
    $region13: #{tpu_custom_call.1} parent=1 // pred_fallthru
      _
    // Predicated region
    $region14: #{tpu_custom_call.1} parent=1 // pred_check
      _
    $region15: #{tpu_custom_call.1} parent=1 // pred_check_branch
      %22 = sbr.rel (0) target = $region17
    $region16: #{tpu_custom_call.1} parent=1 // pred_region
      _
    $region17: #{tpu_custom_call.1} parent=1 // pred_fallthru
      _
    // Predicated region
    $region18: #{tpu_custom_call.1} parent=1 // pred_check
      _
    $region19: #{tpu_custom_call.1} parent=1 // pred_check_branch
      %24 = sbr.rel (0) target = $region21
    $region20: #{tpu_custom_call.1} parent=1 // pred_region
      _
    $region21: #{tpu_custom_call.1} parent=1 // pred_fallthru
      _
    // Predicated region
    $region22: #{tpu_custom_call.1} parent=1 // pred_check
      _
    $region23: #{tpu_custom_call.1} parent=1 // pred_check_branch
      %26 = sbr.rel (0) target = $region25
    $region24: #{tpu_custom_call.1} parent=1 // pred_region
      _
    $region25: #{tpu_custom_call.1} parent=1 // pred_fallthru
      _
    // Predicated region
    $region26: #{tpu_custom_call.1} parent=1 // pred_check
      _
    $region27: #{tpu_custom_call.1} parent=1 // pred_check_branch
      %28 = sbr.rel (0) target = $region29
    $region28: #{tpu_custom_call.1} parent=1 // pred_region
      _
    $region29: #{tpu_custom_call.1} parent=1 // pred_fallthru
      _
    %v29 = vld [vmem:[%s0] sm:$0xff]
    %v30 = vld [vmem:[%s0 + $0x8] sm:$0xff]
    %v31 = vld [vmem:[%s0 + $0x10] sm:$0xff]
    %v32 = vld [vmem:[%s0 + $0x18] sm:$0xff]
    %v33 = vld [vmem:[%s0 + $0x20] sm:$0xff]
    %v34 = vld [vmem:[%s0 + $0x28] sm:$0xff]
    %v35 = vld [vmem:[%s0 + $0x30] sm:$0xff]
    %v36 = vld [vmem:[%s0 + $0x38] sm:$0xff]
    %v37 = vld [vmem:[%s0 + $0x40] sm:$0xff]
    %v38 = vld [vmem:[%s0 + $0x48] sm:$0xff]
    %v39 = vld [vmem:[%s0 + $0x50] sm:$0xff]
    %v40 = vld [vmem:[%s0 + $0x58] sm:$0xff]
    %v41 = vld [vmem:[%s0 + $0x60] sm:$0xff]
    %v42 = vld [vmem:[%s0 + $0x68] sm:$0xff]
    %v43 = vld [vmem:[%s0 + $0x70] sm:$0xff]
    %v44 = vld [vmem:[%s0 + $0x78] sm:$0xff]
    %v45 = vld [vmem:[%s1] sm:$0xff]
    %v46 = vld [vmem:[%s1 + $0x8] sm:$0xff]
    %v47 = vld [vmem:[%s1 + $0x10] sm:$0xff]
    %v48 = vld [vmem:[%s1 + $0x18] sm:$0xff]
    %v49 = vld [vmem:[%s3] sm:$0xff]
    %v50 = vld [vmem:[%s3 + $0x8] sm:$0xff]
    %v51 = vld [vmem:[%s3 + $0x10] sm:$0xff]
    %v52 = vld [vmem:[%s3 + $0x18] sm:$0xff]
    %v53 = vld [vmem:[%s3 + $0x20] sm:$0xff]
    %v54 = vld [vmem:[%s3 + $0x28] sm:$0xff]
    %v55 = vld [vmem:[%s3 + $0x30] sm:$0xff]
    %v56 = vld [vmem:[%s3 + $0x38] sm:$0xff]
    %v57 = vld [vmem:[%s3 + $0x40] sm:$0xff]
    %v58 = vld [vmem:[%s3 + $0x48] sm:$0xff]
    %v59 = vld [vmem:[%s3 + $0x50] sm:$0xff]
    %v60 = vld [vmem:[%s3 + $0x58] sm:$0xff]
    %v61 = vld [vmem:[%s3 + $0x60] sm:$0xff]
    %v62 = vld [vmem:[%s3 + $0x68] sm:$0xff]
    %v63 = vld [vmem:[%s3 + $0x70] sm:$0xff]
    %v64 = vld [vmem:[%s3 + $0x78] sm:$0xff]
    %v65 = vld [vmem:[%s2] sm:$0x1]
    %v67 = vlaneseq
    %v68 = vshrl.u32 %v67, 7
    %v69 = vsub.s32 0, %v68
    %v70 = vrot.slane %v65, %v69
    %vm72 = vcmask 261120
    %v74 = vsel %vm72, %v29, 0
    %v77 = vsel %vm72, %v30, 0
    %v80 = vsel %vm72, %v31, 0
    %v83 = vsel %vm72, %v32, 0
    %v86 = vsel %vm72, %v33, 0
    %v89 = vsel %vm72, %v34, 0
    %v92 = vsel %vm72, %v35, 0
    %v95 = vsel %vm72, %v36, 0
    %v98 = vsel %vm72, %v37, 0
    %v101 = vsel %vm72, %v38, 0
    %v104 = vsel %vm72, %v39, 0
    %v107 = vsel %vm72, %v40, 0
    %v110 = vsel %vm72, %v41, 0
    %v113 = vsel %vm72, %v42, 0
    %v116 = vsel %vm72, %v43, 0
    %v119 = vsel %vm72, %v44, 0
    %121 = vmatprep.subr.mxu0 0.0
    %122 = vmatpush1.msra.mxu0 %v45
    %123 = vmatprep.subr.mxu0 0.0
    %124 = vmatpush1.msra.mxu0 %v46
    %125 = vmatprep.subr.mxu0 0.0
    %126 = vmatpush1.msra.mxu0 %v47
    %127 = vmatprep.subr.mxu0 0.0
    %128 = vmatpush1.msra.mxu0 %v48
    %129 = vmatprep.subr.mxu0 0.0
    %130 = vmatpush1.msra.mxu0 0.0
    %131 = vmatprep.subr.mxu0 0.0
    %132 = vmatpush1.msra.mxu0 0.0
    %133 = vmatprep.subr.mxu0 0.0
    %134 = vmatpush1.msra.mxu0 0.0
    %135 = vmatprep.subr.mxu0 0.0
    %136 = vmatpush1.msra.mxu0 0.0
    %137 = vmatprep.subr.mxu0 0.0
    %138 = vmatpush1.msra.mxu0 0.0
    %139 = vmatprep.subr.mxu0 0.0
    %140 = vmatpush1.msra.mxu0 0.0
    %141 = vmatprep.subr.mxu0 0.0
    %142 = vmatpush1.msra.mxu0 0.0
    %143 = vmatprep.subr.mxu0 0.0
    %144 = vmatpush1.msra.mxu0 0.0
    %145 = vmatprep.subr.mxu0 0.0
    %146 = vmatpush1.msra.mxu0 0.0
    %147 = vmatprep.subr.mxu0 0.0
    %148 = vmatpush1.msra.mxu0 0.0
    %149 = vmatprep.subr.mxu0 0.0
    %150 = vmatpush1.msra.mxu0 0.0
    %151 = vmatprep.subr.mxu0 0.0
    %152 = vmatpush1.msra.mxu0 0.0
    %153 = vmatprep.subr.mxu0 0.0
    %154 = vmatpush1.msra.mxu0 0.0
    %155 = vmatprep.subr.mxu0 0.0
    %156 = vmatpush1.msra.mxu0 0.0
    %157 = vmatprep.subr.mxu0 0.0
    %158 = vmatpush1.msra.mxu0 0.0
    %159 = vmatprep.subr.mxu0 0.0
    %160 = vmatpush1.msra.mxu0 0.0
    %161 = vmatprep.subr.mxu0 0.0
    %162 = vmatpush1.msra.mxu0 0.0
    %163 = vmatprep.subr.mxu0 0.0
    %164 = vmatpush1.msra.mxu0 0.0
    %165 = vmatprep.subr.mxu0 0.0
    %166 = vmatpush1.msra.mxu0 0.0
    %167 = vmatprep.subr.mxu0 0.0
    %168 = vmatpush1.msra.mxu0 0.0
    %169 = vmatprep.subr.mxu0 0.0
    %170 = vmatpush1.msra.mxu0 0.0
    %171 = vmatprep.subr.mxu0 0.0
    %172 = vmatpush1.msra.mxu0 0.0
    %173 = vmatprep.subr.mxu0 0.0
    %174 = vmatpush1.msra.mxu0 0.0
    %175 = vmatprep.subr.mxu0 0.0
    %176 = vmatpush1.msra.mxu0 0.0
    %177 = vmatprep.subr.mxu0 0.0
    %178 = vmatpush1.msra.mxu0 0.0
    %179 = vmatprep.subr.mxu0 0.0
    %180 = vmatpush1.msra.mxu0 0.0
    %181 = vmatprep.subr.mxu0 0.0
    %182 = vmatpush1.msra.mxu0 0.0
    %183 = vmatprep.subr.mxu0 0.0
    %184 = vmatpush1.msra.mxu0 0.0
    %185 = vmatprep.mubr.f32.mxu0 0.0
    %186 = vmatmul.mubr.f32.gmra.mrb[0].mxu0 %v74
    %v187 = vpop.f32.mrb[0].mxu0
    %v188 = vadd.f32 %v70, %v187
    %v189 = vpop.f32.mrb[0].mxu0
    %190 = vmatprep.mubr.f32.mxu0 0.0
    %191 = vmatmul.mubr.f32.gmra.mrb[0].mxu0 %v77
    %v192 = vpop.f32.mrb[0].mxu0
    %v193 = vadd.f32 %v70, %v192
    %v194 = vpop.f32.mrb[0].mxu0
    %195 = vmatprep.mubr.f32.mxu0 0.0
    %196 = vmatmul.mubr.f32.gmra.mrb[0].mxu0 %v80
    %v197 = vpop.f32.mrb[0].mxu0
    %v198 = vadd.f32 %v70, %v197
    %v199 = vpop.f32.mrb[0].mxu0
    %200 = vmatprep.mubr.f32.mxu0 0.0
    %201 = vmatmul.mubr.f32.gmra.mrb[0].mxu0 %v83
    %v202 = vpop.f32.mrb[0].mxu0
    %v203 = vadd.f32 %v70, %v202
    %v204 = vpop.f32.mrb[0].mxu0
    %205 = vmatprep.mubr.f32.mxu0 0.0
    %206 = vmatmul.mubr.f32.gmra.mrb[0].mxu0 %v86
    %v207 = vpop.f32.mrb[0].mxu0
    %v208 = vadd.f32 %v70, %v207
    %v209 = vpop.f32.mrb[0].mxu0
    %210 = vmatprep.mubr.f32.mxu0 0.0
    %211 = vmatmul.mubr.f32.gmra.mrb[0].mxu0 %v89
    %v212 = vpop.f32.mrb[0].mxu0
    %v213 = vadd.f32 %v70, %v212
    %v214 = vpop.f32.mrb[0].mxu0
    %215 = vmatprep.mubr.f32.mxu0 0.0
    %216 = vmatmul.mubr.f32.gmra.mrb[0].mxu0 %v92
    %v217 = vpop.f32.mrb[0].mxu0
    %v218 = vadd.f32 %v70, %v217
    %v219 = vpop.f32.mrb[0].mxu0
    %220 = vmatprep.mubr.f32.mxu0 0.0
    %221 = vmatmul.mubr.f32.gmra.mrb[0].mxu0 %v95
    %v222 = vpop.f32.mrb[0].mxu0
    %v223 = vadd.f32 %v70, %v222
    %v224 = vpop.f32.mrb[0].mxu0
    %225 = vmatprep.mubr.f32.mxu0 0.0
    %226 = vmatmul.mubr.f32.gmra.mrb[0].mxu0 %v98
    %v227 = vpop.f32.mrb[0].mxu0
    %v228 = vadd.f32 %v70, %v227
    %v229 = vpop.f32.mrb[0].mxu0
    %230 = vmatprep.mubr.f32.mxu0 0.0
    %231 = vmatmul.mubr.f32.gmra.mrb[0].mxu0 %v101
    %v232 = vpop.f32.mrb[0].mxu0
    %v233 = vadd.f32 %v70, %v232
    %v234 = vpop.f32.mrb[0].mxu0
    %235 = vmatprep.mubr.f32.mxu0 0.0
    %236 = vmatmul.mubr.f32.gmra.mrb[0].mxu0 %v104
    %v237 = vpop.f32.mrb[0].mxu0
    %v238 = vadd.f32 %v70, %v237
    %v239 = vpop.f32.mrb[0].mxu0
    %240 = vmatprep.mubr.f32.mxu0 0.0
    %241 = vmatmul.mubr.f32.gmra.mrb[0].mxu0 %v107
    %v242 = vpop.f32.mrb[0].mxu0
    %v243 = vadd.f32 %v70, %v242
    %v244 = vpop.f32.mrb[0].mxu0
    %245 = vmatprep.mubr.f32.mxu0 0.0
    %246 = vmatmul.mubr.f32.gmra.mrb[0].mxu0 %v110
    %v247 = vpop.f32.mrb[0].mxu0
    %v248 = vadd.f32 %v70, %v247
    %v249 = vpop.f32.mrb[0].mxu0
    %250 = vmatprep.mubr.f32.mxu0 0.0
    %251 = vmatmul.mubr.f32.gmra.mrb[0].mxu0 %v113
    %v252 = vpop.f32.mrb[0].mxu0
    %v253 = vadd.f32 %v70, %v252
    %v254 = vpop.f32.mrb[0].mxu0
    %255 = vmatprep.mubr.f32.mxu0 0.0
    %256 = vmatmul.mubr.f32.gmra.mrb[0].mxu0 %v116
    %v257 = vpop.f32.mrb[0].mxu0
    %v258 = vadd.f32 %v70, %v257
    %v259 = vpop.f32.mrb[0].mxu0
    %260 = vmatprep.mubr.f32.mxu0 0.0
    %261 = vmatmul.mubr.f32.gmra.mrb[0].mxu0 %v119
    %v262 = vpop.f32.mrb[0].mxu0
    %v263 = vadd.f32 %v70, %v262
    %v264 = vpop.f32.mrb[0].mxu0
    %265 = vdwg.mxu0
    %v266 = vmax.f32 %v188, 0.0
    %v267 = vmax.f32 %v193, 0.0
    %v268 = vmax.f32 %v198, 0.0
    %v269 = vmax.f32 %v203, 0.0
    %v270 = vmax.f32 %v208, 0.0
    %v271 = vmax.f32 %v213, 0.0
    %v272 = vmax.f32 %v218, 0.0
    %v273 = vmax.f32 %v223, 0.0
    %v274 = vmax.f32 %v228, 0.0
    %v275 = vmax.f32 %v233, 0.0
    %v276 = vmax.f32 %v238, 0.0
    %v277 = vmax.f32 %v243, 0.0
    %v278 = vmax.f32 %v248, 0.0
    %v279 = vmax.f32 %v253, 0.0
    %v280 = vmax.f32 %v258, 0.0
    %v281 = vmax.f32 %v263, 0.0
    %v282 = vld [vmem:[%s4] sm:$0x1]
    %v284 = vlaneseq
    %v285 = vshrl.u32 %v284, 7
    %v286 = vsub.s32 0, %v285
    %v287 = vrot.slane %v282, %v286
    %289 = vmatprep.subr.mxu0 0.0
    %290 = vmatpush1.msra.mxu0 %v49
    %291 = vmatprep.subr.mxu0 0.0
    %292 = vmatpush1.msra.mxu0 %v50
    %293 = vmatprep.subr.mxu0 0.0
    %294 = vmatpush1.msra.mxu0 %v51
    %295 = vmatprep.subr.mxu0 0.0
    %296 = vmatpush1.msra.mxu0 %v52
    %297 = vmatprep.subr.mxu0 0.0
    %298 = vmatpush1.msra.mxu0 %v53
    %299 = vmatprep.subr.mxu0 0.0
    %300 = vmatpush1.msra.mxu0 %v54
    %301 = vmatprep.subr.mxu0 0.0
    %302 = vmatpush1.msra.mxu0 %v55
    %303 = vmatprep.subr.mxu0 0.0
    %304 = vmatpush1.msra.mxu0 %v56
    %305 = vmatprep.subr.mxu0 0.0
    %306 = vmatpush1.msra.mxu0 %v57
    %307 = vmatprep.subr.mxu0 0.0
    %308 = vmatpush1.msra.mxu0 %v58
    %309 = vmatprep.subr.mxu0 0.0
    %310 = vmatpush1.msra.mxu0 %v59
    %311 = vmatprep.subr.mxu0 0.0
    %312 = vmatpush1.msra.mxu0 %v60
    %313 = vmatprep.subr.mxu0 0.0
    %314 = vmatpush1.msra.mxu0 %v61
    %315 = vmatprep.subr.mxu0 0.0
    %316 = vmatpush1.msra.mxu0 %v62
    %317 = vmatprep.subr.mxu0 0.0
    %318 = vmatpush1.msra.mxu0 %v63
    %319 = vmatprep.subr.mxu0 0.0
    %320 = vmatpush1.msra.mxu0 %v64
    %321 = vmatprep.subr.mxu0 0.0
    %322 = vmatpush1.msra.mxu0 0.0
    %323 = vmatprep.subr.mxu0 0.0
    %324 = vmatpush1.msra.mxu0 0.0
    %325 = vmatprep.subr.mxu0 0.0
    %326 = vmatpush1.msra.mxu0 0.0
    %327 = vmatprep.subr.mxu0 0.0
    %328 = vmatpush1.msra.mxu0 0.0
    %329 = vmatprep.subr.mxu0 0.0
    %330 = vmatpush1.msra.mxu0 0.0
    %331 = vmatprep.subr.mxu0 0.0
    %332 = vmatpush1.msra.mxu0 0.0
    %333 = vmatprep.subr.mxu0 0.0
    %334 = vmatpush1.msra.mxu0 0.0
    %335 = vmatprep.subr.mxu0 0.0
    %336 = vmatpush1.msra.mxu0 0.0
    %337 = vmatprep.subr.mxu0 0.0
    %338 = vmatpush1.msra.mxu0 0.0
    %339 = vmatprep.subr.mxu0 0.0
    %340 = vmatpush1.msra.mxu0 0.0
    %341 = vmatprep.subr.mxu0 0.0
    %342 = vmatpush1.msra.mxu0 0.0
    %343 = vmatprep.subr.mxu0 0.0
    %344 = vmatpush1.msra.mxu0 0.0
    %345 = vmatprep.subr.mxu0 0.0
    %346 = vmatpush1.msra.mxu0 0.0
    %347 = vmatprep.subr.mxu0 0.0
    %348 = vmatpush1.msra.mxu0 0.0
    %349 = vmatprep.subr.mxu0 0.0
    %350 = vmatpush1.msra.mxu0 0.0
    %351 = vmatprep.subr.mxu0 0.0
    %352 = vmatpush1.msra.mxu0 0.0
    %353 = vmatprep.mubr.f32.mxu0 0.0
    %354 = vmatmul.mubr.f32.gmra.mrb[0].mxu0 %v266
    %v355 = vpop.f32.mrb[0].mxu0
    %v356 = vadd.f32 %v287, %v355
    %v357 = vpop.f32.mrb[0].mxu0
    %358 = vmatprep.mubr.f32.mxu0 0.0
    %359 = vmatmul.mubr.f32.gmra.mrb[0].mxu0 %v267
    %v360 = vpop.f32.mrb[0].mxu0
    %v361 = vadd.f32 %v287, %v360
    %v362 = vpop.f32.mrb[0].mxu0
    %363 = vmatprep.mubr.f32.mxu0 0.0
    %364 = vmatmul.mubr.f32.gmra.mrb[0].mxu0 %v268
    %v365 = vpop.f32.mrb[0].mxu0
    %v366 = vadd.f32 %v287, %v365
    %v367 = vpop.f32.mrb[0].mxu0
    %368 = vmatprep.mubr.f32.mxu0 0.0
    %369 = vmatmul.mubr.f32.gmra.mrb[0].mxu0 %v269
    %v370 = vpop.f32.mrb[0].mxu0
    %v371 = vadd.f32 %v287, %v370
    %v372 = vpop.f32.mrb[0].mxu0
    %373 = vmatprep.mubr.f32.mxu0 0.0
    %374 = vmatmul.mubr.f32.gmra.mrb[0].mxu0 %v270
    %v375 = vpop.f32.mrb[0].mxu0
    %v376 = vadd.f32 %v287, %v375
    %v377 = vpop.f32.mrb[0].mxu0
    %378 = vmatprep.mubr.f32.mxu0 0.0
    %379 = vmatmul.mubr.f32.gmra.mrb[0].mxu0 %v271
    %v380 = vpop.f32.mrb[0].mxu0
    %v381 = vadd.f32 %v287, %v380
    %v382 = vpop.f32.mrb[0].mxu0
    %383 = vmatprep.mubr.f32.mxu0 0.0
    %384 = vmatmul.mubr.f32.gmra.mrb[0].mxu0 %v272
    %v385 = vpop.f32.mrb[0].mxu0
    %v386 = vadd.f32 %v287, %v385
    %v387 = vpop.f32.mrb[0].mxu0
    %388 = vmatprep.mubr.f32.mxu0 0.0
    %389 = vmatmul.mubr.f32.gmra.mrb[0].mxu0 %v273
    %v390 = vpop.f32.mrb[0].mxu0
    %v391 = vadd.f32 %v287, %v390
    %v392 = vpop.f32.mrb[0].mxu0
    %393 = vmatprep.mubr.f32.mxu0 0.0
    %394 = vmatmul.mubr.f32.gmra.mrb[0].mxu0 %v274
    %v395 = vpop.f32.mrb[0].mxu0
    %v396 = vadd.f32 %v287, %v395
    %v397 = vpop.f32.mrb[0].mxu0
    %398 = vmatprep.mubr.f32.mxu0 0.0
    %399 = vmatmul.mubr.f32.gmra.mrb[0].mxu0 %v275
    %v400 = vpop.f32.mrb[0].mxu0
    %v401 = vadd.f32 %v287, %v400
    %v402 = vpop.f32.mrb[0].mxu0
    %403 = vmatprep.mubr.f32.mxu0 0.0
    %404 = vmatmul.mubr.f32.gmra.mrb[0].mxu0 %v276
    %v405 = vpop.f32.mrb[0].mxu0
    %v406 = vadd.f32 %v287, %v405
    %v407 = vpop.f32.mrb[0].mxu0
    %408 = vmatprep.mubr.f32.mxu0 0.0
    %409 = vmatmul.mubr.f32.gmra.mrb[0].mxu0 %v277
    %v410 = vpop.f32.mrb[0].mxu0
    %v411 = vadd.f32 %v287, %v410
    %v412 = vpop.f32.mrb[0].mxu0
    %413 = vmatprep.mubr.f32.mxu0 0.0
    %414 = vmatmul.mubr.f32.gmra.mrb[0].mxu0 %v278
    %v415 = vpop.f32.mrb[0].mxu0
    %v416 = vadd.f32 %v287, %v415
    %v417 = vpop.f32.mrb[0].mxu0
    %418 = vmatprep.mubr.f32.mxu0 0.0
    %419 = vmatmul.mubr.f32.gmra.mrb[0].mxu0 %v279
    %v420 = vpop.f32.mrb[0].mxu0
    %v421 = vadd.f32 %v287, %v420
    %v422 = vpop.f32.mrb[0].mxu0
    %423 = vmatprep.mubr.f32.mxu0 0.0
    %424 = vmatmul.mubr.f32.gmra.mrb[0].mxu0 %v280
    %v425 = vpop.f32.mrb[0].mxu0
    %v426 = vadd.f32 %v287, %v425
    %v427 = vpop.f32.mrb[0].mxu0
    %428 = vmatprep.mubr.f32.mxu0 0.0
    %429 = vmatmul.mubr.f32.gmra.mrb[0].mxu0 %v281
    %v430 = vpop.f32.mrb[0].mxu0
    %v431 = vadd.f32 %v287, %v430
    %v432 = vpop.f32.mrb[0].mxu0
    %433 = vdwg.mxu0
    %v434 = vmax.f32 %v356, 0.0
    %v435 = vmax.f32 %v361, 0.0
    %v436 = vmax.f32 %v366, 0.0
    %v437 = vmax.f32 %v371, 0.0
    %v438 = vmax.f32 %v376, 0.0
    %v439 = vmax.f32 %v381, 0.0
    %v440 = vmax.f32 %v386, 0.0
    %v441 = vmax.f32 %v391, 0.0
    %v442 = vmax.f32 %v396, 0.0
    %v443 = vmax.f32 %v401, 0.0
    %v444 = vmax.f32 %v406, 0.0
    %v445 = vmax.f32 %v411, 0.0
    %v446 = vmax.f32 %v416, 0.0
    %v447 = vmax.f32 %v421, 0.0
    %v448 = vmax.f32 %v426, 0.0
    %v449 = vmax.f32 %v431, 0.0
    %v450 = vld [vmem:[%s5] sm:$0x1]
    %v451 = vld [vmem:[#allocation2] sm:$0x1]
    %453 = vset.pattern.permute.xlu0 0
    %454 = vperm.xlu0 %453, %v451
    %v455 = vpop.permute.xlu0 %454
    %v457 = vlaneseq
    %v458 = vshrl.u32 %v457, 7
    %v459 = vsub.s32 0, %v458
    %v460 = vrot.slane %v455, %v459
    %vm461 = vcmask 523264
    %v463 = vsel %vm461, %v450, 0
    %v466 = vsel %vm461, %v434, 0
    %v469 = vsel %vm461, %v435, 0
    %v472 = vsel %vm461, %v436, 0
    %v475 = vsel %vm461, %v437, 0
    %v478 = vsel %vm461, %v438, 0
    %v481 = vsel %vm461, %v439, 0
    %v484 = vsel %vm461, %v440, 0
    %v487 = vsel %vm461, %v441, 0
    %v490 = vsel %vm461, %v442, 0
    %v493 = vsel %vm461, %v443, 0
    %v496 = vsel %vm461, %v444, 0
    %v499 = vsel %vm461, %v445, 0
    %v502 = vsel %vm461, %v446, 0
    %v505 = vsel %vm461, %v447, 0
    %v508 = vsel %vm461, %v448, 0
    %v511 = vsel %vm461, %v449, 0
    %513 = vmatprep.subr.mxu0 0.0
    %514 = vmatpush1.xpose.msra.mxu0 %v466
    %515 = vmatprep.subr.mxu0 0.0
    %516 = vmatpush1.xpose.msra.mxu0 %v469
    %517 = vmatprep.subr.mxu0 0.0
    %518 = vmatpush1.xpose.msra.mxu0 %v472
    %519 = vmatprep.subr.mxu0 0.0
    %520 = vmatpush1.xpose.msra.mxu0 %v475
    %521 = vmatprep.subr.mxu0 0.0
    %522 = vmatpush1.xpose.msra.mxu0 %v478
    %523 = vmatprep.subr.mxu0 0.0
    %524 = vmatpush1.xpose.msra.mxu0 %v481
    %525 = vmatprep.subr.mxu0 0.0
    %526 = vmatpush1.xpose.msra.mxu0 %v484
    %527 = vmatprep.subr.mxu0 0.0
    %528 = vmatpush1.xpose.msra.mxu0 %v487
    %529 = vmatprep.subr.mxu0 0.0
    %530 = vmatpush1.xpose.msra.mxu0 %v490
    %531 = vmatprep.subr.mxu0 0.0
    %532 = vmatpush1.xpose.msra.mxu0 %v493
    %533 = vmatprep.subr.mxu0 0.0
    %534 = vmatpush1.xpose.msra.mxu0 %v496
    %535 = vmatprep.subr.mxu0 0.0
    %536 = vmatpush1.xpose.msra.mxu0 %v499
    %537 = vmatprep.subr.mxu0 0.0
    %538 = vmatpush1.xpose.msra.mxu0 %v502
    %539 = vmatprep.subr.mxu0 0.0
    %540 = vmatpush1.xpose.msra.mxu0 %v505
    %541 = vmatprep.subr.mxu0 0.0
    %542 = vmatpush1.xpose.msra.mxu0 %v508
    %543 = vmatprep.subr.mxu0 0.0
    %544 = vmatpush1.xpose.msra.mxu0 %v511
    %545 = vmatprep.subr.mxu0 0.0
    %546 = vmatpush1.xpose.msra.mxu0 0.0
    %547 = vmatprep.subr.mxu0 0.0
    %548 = vmatpush1.xpose.msra.mxu0 0.0
    %549 = vmatprep.subr.mxu0 0.0
    %550 = vmatpush1.xpose.msra.mxu0 0.0
    %551 = vmatprep.subr.mxu0 0.0
    %552 = vmatpush1.xpose.msra.mxu0 0.0
    %553 = vmatprep.subr.mxu0 0.0
    %554 = vmatpush1.xpose.msra.mxu0 0.0
    %555 = vmatprep.subr.mxu0 0.0
    %556 = vmatpush1.xpose.msra.mxu0 0.0
    %557 = vmatprep.subr.mxu0 0.0
    %558 = vmatpush1.xpose.msra.mxu0 0.0
    %559 = vmatprep.subr.mxu0 0.0
    %560 = vmatpush1.xpose.msra.mxu0 0.0
    %561 = vmatprep.subr.mxu0 0.0
    %562 = vmatpush1.xpose.msra.mxu0 0.0
    %563 = vmatprep.subr.mxu0 0.0
    %564 = vmatpush1.xpose.msra.mxu0 0.0
    %565 = vmatprep.subr.mxu0 0.0
    %566 = vmatpush1.xpose.msra.mxu0 0.0
    %567 = vmatprep.subr.mxu0 0.0
    %568 = vmatpush1.xpose.msra.mxu0 0.0
    %569 = vmatprep.subr.mxu0 0.0
    %570 = vmatpush1.xpose.msra.mxu0 0.0
    %571 = vmatprep.subr.mxu0 0.0
    %572 = vmatpush1.xpose.msra.mxu0 0.0
    %573 = vmatprep.subr.mxu0 0.0
    %574 = vmatpush1.xpose.msra.mxu0 0.0
    %575 = vmatprep.subr.mxu0 0.0
    %576 = vmatpush1.xpose.msra.mxu0 0.0
    %577 = vmatprep.mubr.f32.mxu0 0.0
    %578 = vmatmul.mubr.f32.gmra.mrb[0].mxu0 %v463
    %v579 = vpop.f32.mrb[0].mxu0
    %v580 = vadd.f32 %v460, %v579
    %v581 = vpop.f32.mrb[0].mxu0
    %582 = vdwg.mxu0
    %v583 = vsub.f32 0.0, %v580
    %v584 = vmul.f32 %v583, 1.442695
    %v585 = vpow.pop %v584
    %v586 = vadd.f32 %v585, 1.0
    %v587 = vrcp.pop %v586
    %v588 = vmul.f32 1.0, %v587
    %589 = vst [vmem:[#allocation3] sm:$0x1] %v588
    // Predicated region
    $region30: #{tpu_custom_call.1} parent=1 // pred_check
      _
    $region31: #{tpu_custom_call.1} parent=1 // pred_check_branch
      %591 = sbr.rel (0) target = $region33
    $region32: #{tpu_custom_call.1} parent=1 // pred_region
      %s593 = ssub.s32 16, 16
      %594 = vsyncadd [#allocation4], %s593
      %s596 = sshll.u32 [#allocation3], 4
      %s597 = int_to_ptr.vmem [resolvable:$true] %s596
      %599 = dma.vmem_to_hbm [thread:$0]  %s597, 16, %s7, [#allocation4]
    $region33: #{tpu_custom_call.1} parent=1 // pred_fallthru
      _
    // Predicated region
    $region34: #{tpu_custom_call.1} parent=1 // pred_check
      _
    $region35: #{tpu_custom_call.1} parent=1 // pred_check_branch
      %601 = sbr.rel (0) target = $region37
    $region36: #{tpu_custom_call.1} parent=1 // pred_region
      %602 = dma.done [#allocation4], 16
    $region37: #{tpu_custom_call.1} parent=1 // pred_fallthru
      _
    %603 = vsyncpa [#allocation4], 1

</llo_original>
